<compile_context>
chip_gen: v6e
topology: v6e:2x2x1
jax: 0.10.0
libtpu: 0.0.40
codegen_flags: <defaults>
</compile_context>

<pallas_src>
import math

import jax
import jax.numpy as jnp
from jax.experimental import pallas as pl
from jax.experimental.pallas import tpu as pltpu


def _mlp_softmax_kernel(x_ref, w1_ref, wh_ref, w5_ref, b_ref, o_ref):
    # x: (tm, 2) f32 | w1: (2, 128) f32 | wh: (3, 128, 128) bf16
    # w5: (128, 2) bf16 | b: (5, 128) f32 (row 4 holds b5 in lanes 0:2)
    x = x_ref[...]
    w1 = w1_ref[...]
    b = b_ref[...]

    # Layer 1: Linear(2 -> 128) + ReLU as a VPU broadcast FMA (no MXU push/pop
    # for a K=2 matmul on the latency-critical chain).
    h = x[:, 0:1] * w1[0:1, :] + x[:, 1:2] * w1[1:2, :] + b[0:1, :]
    h = jnp.maximum(h, 0.0)

    # Layers 2-4: Linear(128 -> 128) + ReLU. bf16 operands on the MXU, f32
    # accumulate; bias add / ReLU in f32 (v5e has no bf16 VPU path).
    for k in range(3):
        h = jnp.dot(
            h.astype(jnp.bfloat16), wh_ref[k],
            preferred_element_type=jnp.float32,
        ) + b[k + 1:k + 2, :]
        h = jnp.maximum(h, 0.0)

    # Layer 5: Linear(128 -> 2)
    logits = jnp.dot(
        h.astype(jnp.bfloat16), w5_ref[...],
        preferred_element_type=jnp.float32,
    ) + b[4:5, 0:2]

    # Softmax over the 2-wide feature axis, written as an exact sigmoid of the
    # logit difference: softmax([l0, l1]) = [1 - s, s] with s = sigmoid(l1-l0).
    d = logits[:, 1:2] - logits[:, 0:1]
    p1 = 1.0 / (1.0 + jnp.exp(-d))
    o_ref[:, 0:1] = (1.0 - p1).astype(o_ref.dtype)
    o_ref[:, 1:2] = p1.astype(o_ref.dtype)


def mlp_softmax(x, packed, *, tm=None):
    """x: (B, 2) float32. packed: (w1 f32 (2,128), wh bf16 (3,128,128),
    w5 bf16 (128,2), b_all f32 (5,128))."""
    w1, wh, w5, b_all = packed
    B = x.shape[0]
    if tm is None:
        # Tile the batch only when it is large; weights stay resident either way.
        tm = 256 if (B >= 256 and B % 256 == 0) else B
    assert B % tm == 0, "batch must be divisible by the batch tile"
    grid = (B // tm,)

    return pl.pallas_call(
        _mlp_softmax_kernel,
        out_shape=jax.ShapeDtypeStruct((B, 2), jnp.float32),
        grid=grid,
        in_specs=[
            pl.BlockSpec((tm, 2), lambda i: (i, 0)),          # x: tiled over batch
            pl.BlockSpec(w1.shape, lambda i: (0, 0)),          # weights: resident
            pl.BlockSpec(wh.shape, lambda i: (0, 0, 0)),
            pl.BlockSpec(w5.shape, lambda i: (0, 0)),
            pl.BlockSpec(b_all.shape, lambda i: (0, 0)),
        ],
        out_specs=pl.BlockSpec((tm, 2), lambda i: (i, 0)),
        compiler_params=pltpu.CompilerParams(
            dimension_semantics=("parallel",),                 # shard batch on v7x's 2 TCs
        ),
    )(x, w1, wh, w5, b_all)


def init_params(key):
    """Deterministic init mimicking PyTorch nn.Linear defaults:
    U(-1/sqrt(fan_in), 1/sqrt(fan_in)) for both weight and bias."""
    dims = [(2, 128), (128, 128), (128, 128), (128, 128), (128, 2)]
    params = []
    for fan_in, fan_out in dims:
        key, kw, kb = jax.random.split(key, 3)
        bound = 1.0 / math.sqrt(fan_in)
        w = jax.random.uniform(kw, (fan_in, fan_out), jnp.float32, -bound, bound)
        b = jax.random.uniform(kb, (fan_out,), jnp.float32, -bound, bound)
        params.append((w, b))
    return params


def pack_params(params):
    """Pack into kernel layout: hidden weights stacked + bf16, biases stacked."""
    (w1, b1), (w2, b2), (w3, b3), (w4, b4), (w5, b5) = params
    wh = jnp.stack([w2, w3, w4], axis=0).astype(jnp.bfloat16)   # (3, 128, 128)
    w5p = w5.astype(jnp.bfloat16)                               # (128, 2)
    b_all = jnp.zeros((5, 128), jnp.float32)
    b_all = b_all.at[0].set(b1)
    b_all = b_all.at[1].set(b2)
    b_all = b_all.at[2].set(b3)
    b_all = b_all.at[3].set(b4)
    b_all = b_all.at[4, :2].set(b5)
    return (w1.astype(jnp.float32), wh, w5p, b_all)


def reference(x, packed):
    """Pure-JAX forward (f32 math) using the same (bf16-rounded) weights."""
    w1, wh, w5, b_all = packed
    h = x @ w1 + b_all[0]
    h = jnp.maximum(h, 0.0)
    for k in range(3):
        h = h @ wh[k].astype(jnp.float32) + b_all[k + 1]
        h = jnp.maximum(h, 0.0)
    logits = h @ w5.astype(jnp.float32) + b_all[4, :2]
    return jax.nn.softmax(logits, axis=1)


if __name__ == "__main__":
    key = jax.random.PRNGKey(0)
    key, kx = jax.random.split(key)
    B = 8
    x = jax.random.normal(kx, (B, 2), jnp.float32)

    params = init_params(key)
    packed = pack_params(params)

    out = mlp_softmax(x, packed)
    out = jax.block_until_ready(out)

    ref = reference(x, packed)
    assert out.shape == (B, 2)
    # Kernel feeds bf16 activations to the MXU; tolerance sized for that.
    assert jnp.allclose(out, ref, atol=5e-3, rtol=0.0), (
        f"max err {jnp.max(jnp.abs(out - ref))}"
    )
    # Rows must sum to 1 (softmax semantics).
    assert jnp.allclose(jnp.sum(out, axis=1), 1.0, atol=1e-5)
    print("KERNEL_OK")
</pallas_src>

<mosaic_0001>
module attributes {stable_mosaic.version = 11 : i64} {
  func.func @_mlp_softmax_kernel(%arg0: i32, %arg1: memref<8x2xf32, #tpu.memory_space<vmem>>, %arg2: memref<2x128xf32, #tpu.memory_space<vmem>>, %arg3: memref<3x128x128xbf16, #tpu.memory_space<vmem>>, %arg4: memref<128x2xbf16, #tpu.memory_space<vmem>>, %arg5: memref<5x128xf32, #tpu.memory_space<vmem>>, %arg6: memref<8x2xf32, #tpu.memory_space<vmem>>) attributes {dimension_semantics = [#tpu.dimension_semantics<parallel>], iteration_bounds = array<i64: 1>, scalar_prefetch = 0 : i64, scratch_operands = 0 : i64, tpu.core_type = #tpu.core_type<tc>, window_params = [{transform_indices = @transform_0, window_bounds = array<i64: 8, 2>}, {pipeline_mode = #tpu.pipeline_mode<synchronous>, transform_indices = @transform_1, window_bounds = array<i64: 2, 128>}, {pipeline_mode = #tpu.pipeline_mode<synchronous>, transform_indices = @transform_2, window_bounds = array<i64: 3, 128, 128>}, {pipeline_mode = #tpu.pipeline_mode<synchronous>, transform_indices = @transform_3, window_bounds = array<i64: 128, 2>}, {pipeline_mode = #tpu.pipeline_mode<synchronous>, transform_indices = @transform_4, window_bounds = array<i64: 5, 128>}, {transform_indices = @transform_5, window_bounds = array<i64: 8, 2>}]} {
    %c0 = arith.constant 0 : index
    %c0_0 = arith.constant 0 : index
    %0 = vector.load %arg1[%c0, %c0_0] : memref<8x2xf32, #tpu.memory_space<vmem>>, vector<8x2xf32>
    %c0_1 = arith.constant 0 : index
    %c0_2 = arith.constant 0 : index
    %1 = vector.load %arg2[%c0_1, %c0_2] : memref<2x128xf32, #tpu.memory_space<vmem>>, vector<2x128xf32>
    %c0_3 = arith.constant 0 : index
    %c0_4 = arith.constant 0 : index
    %2 = vector.load %arg5[%c0_3, %c0_4] : memref<5x128xf32, #tpu.memory_space<vmem>>, vector<5x128xf32>
    %3 = vector.extract_strided_slice %0 {offsets = [0, 0], sizes = [8, 1], strides = [1, 1]} : vector<8x2xf32> to vector<8x1xf32>
    %4 = vector.extract_strided_slice %1 {offsets = [0, 0], sizes = [1, 128], strides = [1, 1]} : vector<2x128xf32> to vector<1x128xf32>
    %5 = vector.broadcast %3 : vector<8x1xf32> to vector<8x128xf32>
    %6 = vector.broadcast %4 : vector<1x128xf32> to vector<8x128xf32>
    %7 = arith.mulf %5, %6 : vector<8x128xf32>
    %8 = vector.extract_strided_slice %0 {offsets = [0, 1], sizes = [8, 1], strides = [1, 1]} : vector<8x2xf32> to vector<8x1xf32>
    %9 = vector.extract_strided_slice %1 {offsets = [1, 0], sizes = [1, 128], strides = [1, 1]} : vector<2x128xf32> to vector<1x128xf32>
    %10 = vector.broadcast %8 : vector<8x1xf32> to vector<8x128xf32>
    %11 = vector.broadcast %9 : vector<1x128xf32> to vector<8x128xf32>
    %12 = arith.mulf %10, %11 : vector<8x128xf32>
    %13 = arith.addf %7, %12 : vector<8x128xf32>
    %14 = vector.extract_strided_slice %2 {offsets = [0, 0], sizes = [1, 128], strides = [1, 1]} : vector<5x128xf32> to vector<1x128xf32>
    %15 = vector.broadcast %14 : vector<1x128xf32> to vector<8x128xf32>
    %16 = arith.addf %13, %15 : vector<8x128xf32>
    %cst = arith.constant 0.000000e+00 : f32
    %17 = vector.broadcast %cst : f32 to vector<8x128xf32>
    %18 = arith.maximumf %16, %17 : vector<8x128xf32>
    %19 = arith.truncf %18 : vector<8x128xf32> to vector<8x128xbf16>
    %c0_5 = arith.constant 0 : index
    %c0_6 = arith.constant 0 : index
    %c0_7 = arith.constant 0 : index
    %20 = vector.load %arg3[%c0_5, %c0_6, %c0_7] : memref<3x128x128xbf16, #tpu.memory_space<vmem>>, vector<1x128x128xbf16>
    %21 = vector.shape_cast %20 : vector<1x128x128xbf16> to vector<128x128xbf16>
    %cst_8 = arith.constant dense<0.000000e+00> : vector<8x128xf32>
    %22 = tpu.matmul %19, %21, %cst_8 {dimension_numbers = #tpu.dot_dimension_numbers<[1], [0], [0], [1], [0, 0, 1, 1], [], []>} : vector<8x128xbf16>, vector<128x128xbf16>, vector<8x128xf32> -> vector<8x128xf32>
    %23 = vector.extract_strided_slice %2 {offsets = [1, 0], sizes = [1, 128], strides = [1, 1]} : vector<5x128xf32> to vector<1x128xf32>
    %24 = vector.broadcast %23 : vector<1x128xf32> to vector<8x128xf32>
    %25 = arith.addf %22, %24 : vector<8x128xf32>
    %cst_9 = arith.constant 0.000000e+00 : f32
    %26 = vector.broadcast %cst_9 : f32 to vector<8x128xf32>
    %27 = arith.maximumf %25, %26 : vector<8x128xf32>
    %28 = arith.truncf %27 : vector<8x128xf32> to vector<8x128xbf16>
    %c1 = arith.constant 1 : index
    %c0_10 = arith.constant 0 : index
    %c0_11 = arith.constant 0 : index
    %29 = vector.load %arg3[%c1, %c0_10, %c0_11] : memref<3x128x128xbf16, #tpu.memory_space<vmem>>, vector<1x128x128xbf16>
    %30 = vector.shape_cast %29 : vector<1x128x128xbf16> to vector<128x128xbf16>
    %cst_12 = arith.constant dense<0.000000e+00> : vector<8x128xf32>
    %31 = tpu.matmul %28, %30, %cst_12 {dimension_numbers = #tpu.dot_dimension_numbers<[1], [0], [0], [1], [0, 0, 1, 1], [], []>} : vector<8x128xbf16>, vector<128x128xbf16>, vector<8x128xf32> -> vector<8x128xf32>
    %32 = vector.extract_strided_slice %2 {offsets = [2, 0], sizes = [1, 128], strides = [1, 1]} : vector<5x128xf32> to vector<1x128xf32>
    %33 = vector.broadcast %32 : vector<1x128xf32> to vector<8x128xf32>
    %34 = arith.addf %31, %33 : vector<8x128xf32>
    %cst_13 = arith.constant 0.000000e+00 : f32
    %35 = vector.broadcast %cst_13 : f32 to vector<8x128xf32>
    %36 = arith.maximumf %34, %35 : vector<8x128xf32>
    %37 = arith.truncf %36 : vector<8x128xf32> to vector<8x128xbf16>
    %c2 = arith.constant 2 : index
    %c0_14 = arith.constant 0 : index
    %c0_15 = arith.constant 0 : index
    %38 = vector.load %arg3[%c2, %c0_14, %c0_15] : memref<3x128x128xbf16, #tpu.memory_space<vmem>>, vector<1x128x128xbf16>
    %39 = vector.shape_cast %38 : vector<1x128x128xbf16> to vector<128x128xbf16>
    %cst_16 = arith.constant dense<0.000000e+00> : vector<8x128xf32>
    %40 = tpu.matmul %37, %39, %cst_16 {dimension_numbers = #tpu.dot_dimension_numbers<[1], [0], [0], [1], [0, 0, 1, 1], [], []>} : vector<8x128xbf16>, vector<128x128xbf16>, vector<8x128xf32> -> vector<8x128xf32>
    %41 = vector.extract_strided_slice %2 {offsets = [3, 0], sizes = [1, 128], strides = [1, 1]} : vector<5x128xf32> to vector<1x128xf32>
    %42 = vector.broadcast %41 : vector<1x128xf32> to vector<8x128xf32>
    %43 = arith.addf %40, %42 : vector<8x128xf32>
    %cst_17 = arith.constant 0.000000e+00 : f32
    %44 = vector.broadcast %cst_17 : f32 to vector<8x128xf32>
    %45 = arith.maximumf %43, %44 : vector<8x128xf32>
    %46 = arith.truncf %45 : vector<8x128xf32> to vector<8x128xbf16>
    %c0_18 = arith.constant 0 : index
    %c0_19 = arith.constant 0 : index
    %47 = vector.load %arg4[%c0_18, %c0_19] : memref<128x2xbf16, #tpu.memory_space<vmem>>, vector<128x2xbf16>
    %cst_20 = arith.constant dense<0.000000e+00> : vector<8x2xf32>
    %48 = tpu.matmul %46, %47, %cst_20 {dimension_numbers = #tpu.dot_dimension_numbers<[1], [0], [0], [1], [0, 0, 1, 1], [], []>} : vector<8x128xbf16>, vector<128x2xbf16>, vector<8x2xf32> -> vector<8x2xf32>
    %49 = vector.extract_strided_slice %2 {offsets = [4, 0], sizes = [1, 2], strides = [1, 1]} : vector<5x128xf32> to vector<1x2xf32>
    %50 = vector.broadcast %49 : vector<1x2xf32> to vector<8x2xf32>
    %51 = arith.addf %48, %50 : vector<8x2xf32>
    %52 = vector.extract_strided_slice %51 {offsets = [0, 1], sizes = [8, 1], strides = [1, 1]} : vector<8x2xf32> to vector<8x1xf32>
    %53 = vector.extract_strided_slice %51 {offsets = [0, 0], sizes = [8, 1], strides = [1, 1]} : vector<8x2xf32> to vector<8x1xf32>
    %54 = arith.subf %52, %53 : vector<8x1xf32>
    %cst_21 = arith.constant 0.000000e+00 : f32
    %55 = vector.broadcast %cst_21 : f32 to vector<8x1xf32>
    %56 = arith.subf %55, %54 : vector<8x1xf32>
    %57 = math.exp %56 : vector<8x1xf32>
    %cst_22 = arith.constant 1.000000e+00 : f32
    %58 = vector.broadcast %cst_22 : f32 to vector<8x1xf32>
    %59 = arith.addf %58, %57 : vector<8x1xf32>
    %cst_23 = arith.constant 1.000000e+00 : f32
    %60 = vector.broadcast %cst_23 : f32 to vector<8x1xf32>
    %61 = arith.divf %60, %59 : vector<8x1xf32>
    %cst_24 = arith.constant 1.000000e+00 : f32
    %62 = vector.broadcast %cst_24 : f32 to vector<8x1xf32>
    %63 = arith.subf %62, %61 : vector<8x1xf32>
    %c0_25 = arith.constant 0 : index
    %c0_26 = arith.constant 0 : index
    %64 = vector.load %arg6[%c0_25, %c0_26] : memref<8x2xf32, #tpu.memory_space<vmem>>, vector<8x1xf32>
    tpu.vector_store %arg6[%c0_25, %c0_26], %63 {strides = array<i32>} : memref<8x2xf32, #tpu.memory_space<vmem>>, vector<8x1xf32>,
    %c0_27 = arith.constant 0 : index
    %c1_28 = arith.constant 1 : index
    %65 = vector.load %arg6[%c0_27, %c1_28] : memref<8x2xf32, #tpu.memory_space<vmem>>, vector<8x1xf32>
    tpu.vector_store %arg6[%c0_27, %c1_28], %61 {strides = array<i32>} : memref<8x2xf32, #tpu.memory_space<vmem>>, vector<8x1xf32>,
    return
  }
  func.func @transform_0(%arg0: i32) -> (i32, i32) {
    %c0_i32 = arith.constant 0 : i32
    %c0_i32_0 = arith.constant 0 : i32
    return %arg0, %c0_i32 : i32, i32
  }
  func.func @transform_1(%arg0: i32) -> (i32, i32) {
    %c0_i32 = arith.constant 0 : i32
    %c0_i32_0 = arith.constant 0 : i32
    %c0_i32_1 = arith.constant 0 : i32
    return %c0_i32, %c0_i32_0 : i32, i32
  }
  func.func @transform_2(%arg0: i32) -> (i32, i32, i32) {
    %c0_i32 = arith.constant 0 : i32
    %c0_i32_0 = arith.constant 0 : i32
    %c0_i32_1 = arith.constant 0 : i32
    %c0_i32_2 = arith.constant 0 : i32
    return %c0_i32, %c0_i32_0, %c0_i32_1 : i32, i32, i32
  }
  func.func @transform_3(%arg0: i32) -> (i32, i32) {
    %c0_i32 = arith.constant 0 : i32
    %c0_i32_0 = arith.constant 0 : i32
    %c0_i32_1 = arith.constant 0 : i32
    return %c0_i32, %c0_i32_0 : i32, i32
  }
  func.func @transform_4(%arg0: i32) -> (i32, i32) {
    %c0_i32 = arith.constant 0 : i32
    %c0_i32_0 = arith.constant 0 : i32
    %c0_i32_1 = arith.constant 0 : i32
    return %c0_i32, %c0_i32_0 : i32, i32
  }
  func.func @transform_5(%arg0: i32) -> (i32, i32) {
    %c0_i32 = arith.constant 0 : i32
    %c0_i32_0 = arith.constant 0 : i32
    return %arg0, %c0_i32 : i32, i32
  }
}

</mosaic_0001>

<llo_original>
// kernel: tpu_custom_call.1
$region0: #{tpu_custom_call.1}
  #allocation0 [shape = 'u32[]', space=smem, size = 0x4, offset = 0x4, fixed_abs, tag = 'smem constant byte address 0x4 - core index']
  #allocation1 [shape = 'u32[144,128]{1,0:T(1,128)}', space=vmem, size = 0x12000, scoped, tag = 'internal scratch']
  %s0 = inlined_call_operand.vmem [shape: f32[8,2], index: 0, kind: input, shape index: {}]
  %s1 = inlined_call_operand.vmem [shape: f32[2,128], index: 1, kind: input, shape index: {}]
  %s2 = inlined_call_operand.hbm [shape: bf16[3,128,128], index: 2, kind: input, shape index: {}]
  %s3 = inlined_call_operand.vmem [shape: bf16[128,2], index: 3, kind: input, shape index: {}]
  %s4 = inlined_call_operand.vmem [shape: f32[5,128], index: 4, kind: input, shape index: {}]
  %s5 = inlined_call_operand.vmem [shape: f32[8,2], index: 5, kind: output, shape index: {}]
  %s6 = sld [smem:[#allocation0]]
  $region34: #{tpu_custom_call.1} parent=0
    _
  %s8 = ssub.s32 1, %s6
  %s9 = scalar_select 0, %s8, %s6
  $region1: #{tpu_custom_call.1} parent=0
    #allocation2 [shape = 'u8[98304]{0}', space=vmem, size = 0x18000, scoped, tag = 'input window, operand 2, single buffered']
    #allocation3 [shape = 's32[1]{0}', space=sflag, size = 0x4, scoped, tag = 'scoped memory for tpu_custom_call.1']
    %10 = vsyncpa [#allocation3], 0
    // Predicated region
    $region2: #{tpu_custom_call.1} parent=1 // pred_check
      _
    $region3: #{tpu_custom_call.1} parent=1 // pred_check_branch
      %12 = sbr.rel (0) target = $region5
    $region4: #{tpu_custom_call.1} parent=1 // pred_region
      _
    $region5: #{tpu_custom_call.1} parent=1 // pred_fallthru
      _
    // Predicated region
    $region6: #{tpu_custom_call.1} parent=1 // pred_check
      _
    $region7: #{tpu_custom_call.1} parent=1 // pred_check_branch
      %14 = sbr.rel (0) target = $region9
    $region8: #{tpu_custom_call.1} parent=1 // pred_region
      _
    $region9: #{tpu_custom_call.1} parent=1 // pred_fallthru
      _
    // Predicated region
    $region10: #{tpu_custom_call.1} parent=1 // pred_check
      _
    $region11: #{tpu_custom_call.1} parent=1 // pred_check_branch
      %16 = sbr.rel (0) target = $region13
    $region12: #{tpu_custom_call.1} parent=1 // pred_region
      %s18 = ssub.s32 3072, 3072
      %19 = vsyncadd [#allocation3], %s18
      %s20 = sshll.u32 [#allocation2], 4
      %s21 = int_to_ptr.vmem [resolvable:$true] %s20
      %26 = dma.hbm_to_vmem [thread:$0]  %s2, 3072, %s21, [#allocation3], 64, 64, 4
    $region13: #{tpu_custom_call.1} parent=1 // pred_fallthru
      _
    // Predicated region
    $region14: #{tpu_custom_call.1} parent=1 // pred_check
      _
    $region15: #{tpu_custom_call.1} parent=1 // pred_check_branch
      %28 = sbr.rel (0) target = $region17
    $region16: #{tpu_custom_call.1} parent=1 // pred_region
      _
    $region17: #{tpu_custom_call.1} parent=1 // pred_fallthru
      _
    // Predicated region
    $region18: #{tpu_custom_call.1} parent=1 // pred_check
      _
    $region19: #{tpu_custom_call.1} parent=1 // pred_check_branch
      %30 = sbr.rel (0) target = $region21
    $region20: #{tpu_custom_call.1} parent=1 // pred_region
      _
    $region21: #{tpu_custom_call.1} parent=1 // pred_fallthru
      _
    // Predicated region
    $region22: #{tpu_custom_call.1} parent=1 // pred_check
      _
    $region23: #{tpu_custom_call.1} parent=1 // pred_check_branch
      %32 = sbr.rel (0) target = $region25
    $region24: #{tpu_custom_call.1} parent=1 // pred_region
      %33 = dma.done [#allocation3], 3072
    $region25: #{tpu_custom_call.1} parent=1 // pred_fallthru
      _
    %v35 = vld [vmem:[%s0] sm:$0xff]
    %v36 = vld [vmem:[%s1] sm:$0x3]
    %v37 = vld [vmem:[%s4] sm:$0x1f]
    %39 = vset.pattern.permute.xlu0 0
    %40 = vperm.xlu0 %39, %v35
    %v41 = vpop.permute.xlu0 %40
    %v43 = vlaneseq
    %v44 = vshrl.u32 %v43, 7
    %v45 = vsub.s32 0, %v44
    %v46 = vrot.slane %v36, %v45
    %v47 = vmul.f32 %v41, %v46
    %48 = vset.pattern.permute.xlu0 1
    %49 = vperm.xlu0 %48, %v35
    %v50 = vpop.permute.xlu0 %49
    %v52 = vlaneseq
    %v53 = vshrl.u32 %v52, 7
    %v54 = vsub.s32 1, %v53
    %v55 = vrot.slane %v36, %v54
    %v56 = vmul.f32 %v50, %v55
    %v57 = vadd.f32 %v47, %v56
    %v58 = vlaneseq
    %v59 = vshrl.u32 %v58, 7
    %v60 = vsub.s32 0, %v59
    %v61 = vrot.slane %v37, %v60
    %v62 = vadd.f32 %v57, %v61
    %v63 = vmax.f32 %v62, 0.0
    %v64 = vpack.c.bf16 %v63, %v63
    %v65 = vld [vmem:[#allocation2] sm:$0xf]
    %v66 = vld [vmem:[#allocation2 + $0x4] sm:$0xf]
    %v67 = vld [vmem:[#allocation2 + $0x8] sm:$0xf]
    %v68 = vld [vmem:[#allocation2 + $0xc] sm:$0xf]
    %v69 = vld [vmem:[#allocation2 + $0x10] sm:$0xf]
    %v70 = vld [vmem:[#allocation2 + $0x14] sm:$0xf]
    %v71 = vld [vmem:[#allocation2 + $0x18] sm:$0xf]
    %v72 = vld [vmem:[#allocation2 + $0x1c] sm:$0xf]
    %v73 = vld [vmem:[#allocation2 + $0x20] sm:$0xf]
    %v74 = vld [vmem:[#allocation2 + $0x24] sm:$0xf]
    %v75 = vld [vmem:[#allocation2 + $0x28] sm:$0xf]
    %v76 = vld [vmem:[#allocation2 + $0x2c] sm:$0xf]
    %v77 = vld [vmem:[#allocation2 + $0x30] sm:$0xf]
    %v78 = vld [vmem:[#allocation2 + $0x34] sm:$0xf]
    %v79 = vld [vmem:[#allocation2 + $0x38] sm:$0xf]
    %v80 = vld [vmem:[#allocation2 + $0x3c] sm:$0xf]
    %v81 = vlaneseq
    %v82 = vshrl.u32 %v81, 7
    %v83 = vsub.s32 1, %v82
    %v84 = vrot.slane %v37, %v83
    %v101 = vunpack.c.l.b16 %v65
    %v102 = vunpack.c.l.b16 %v66
    %v103 = vunpack.c.l.b16 %v67
    %v104 = vunpack.c.l.b16 %v68
    %v105 = vunpack.c.l.b16 %v69
    %v106 = vunpack.c.l.b16 %v70
    %v107 = vunpack.c.l.b16 %v71
    %v108 = vunpack.c.l.b16 %v72
    %v109 = vunpack.c.l.b16 %v73
    %v110 = vunpack.c.l.b16 %v74
    %v111 = vunpack.c.l.b16 %v75
    %v112 = vunpack.c.l.b16 %v76
    %v113 = vunpack.c.l.b16 %v77
    %v114 = vunpack.c.l.b16 %v78
    %v115 = vunpack.c.l.b16 %v79
    %v116 = vunpack.c.l.b16 %v80
    %v117 = vpack.c.b16 %v102, %v101
    %v118 = vpack.c.b16 %v104, %v103
    %v119 = vpack.c.b16 %v106, %v105
    %v120 = vpack.c.b16 %v108, %v107
    %v121 = vpack.c.b16 %v110, %v109
    %v122 = vpack.c.b16 %v112, %v111
    %v123 = vpack.c.b16 %v114, %v113
    %v124 = vpack.c.b16 %v116, %v115
    %133 = vmatprep.subr.bf16.mxu0 0
    %134 = vmatpush1.bf16.msra.mxu0 %v124
    %135 = vmatprep.subr.bf16.mxu0 0
    %136 = vmatpush1.bf16.msra.mxu0 %v123
    %137 = vmatprep.subr.bf16.mxu0 0
    %138 = vmatpush1.bf16.msra.mxu0 %v122
    %139 = vmatprep.subr.bf16.mxu0 0
    %140 = vmatpush1.bf16.msra.mxu0 %v121
    %141 = vmatprep.subr.bf16.mxu0 0
    %142 = vmatpush1.bf16.msra.mxu0 %v120
    %143 = vmatprep.subr.bf16.mxu0 0
    %144 = vmatpush1.bf16.msra.mxu0 %v119
    %145 = vmatprep.subr.bf16.mxu0 0
    %146 = vmatpush1.bf16.msra.mxu0 %v118
    %147 = vmatprep.subr.bf16.mxu0 0
    %148 = vmatpush1.bf16.msra.mxu0 %v117
    %149 = vmatprep.subr.bf16.mxu0 0
    %150 = vmatpush2.bf16.msra.mxu0 0
    %151 = vmatprep.subr.bf16.mxu0 0
    %152 = vmatpush2.bf16.msra.mxu0 0
    %153 = vmatprep.subr.bf16.mxu0 0
    %154 = vmatpush2.bf16.msra.mxu0 0
    %155 = vmatprep.subr.bf16.mxu0 0
    %156 = vmatpush2.bf16.msra.mxu0 0
    %157 = vmatprep.subr.bf16.mxu0 0
    %158 = vmatpush2.bf16.msra.mxu0 0
    %159 = vmatprep.subr.bf16.mxu0 0
    %160 = vmatpush2.bf16.msra.mxu0 0
    %161 = vmatprep.subr.bf16.mxu0 0
    %162 = vmatpush2.bf16.msra.mxu0 0
    %163 = vmatprep.subr.bf16.mxu0 0
    %164 = vmatpush2.bf16.msra.mxu0 0
    %165 = vmatprep.mubr.bf16.mxu0 0
    %166 = vmatmul.mubr.bf16.gmra.mxu0 %v64
    %v167 = vpop.f32.mrf.mxu0
    %v168 = vadd.f32 %v84, %v167
    %v169 = vpop.f32.mrf.mxu0
    %v170 = vpop.f32.mrf.mxu0
    %v171 = vpop.f32.mrf.mxu0
    %172 = vdwg.mxu0
    %v173 = vmax.f32 %v168, 0.0
    %v174 = vpack.c.bf16 %v173, %v173
    %s175 = scalar_lea.vmem [#allocation2], 64
    %v176 = vld [vmem:[%s175] sm:$0xf]
    %v177 = vld [vmem:[%s175 + $0x4] sm:$0xf]
    %v178 = vld [vmem:[%s175 + $0x8] sm:$0xf]
    %v179 = vld [vmem:[%s175 + $0xc] sm:$0xf]
    %v180 = vld [vmem:[%s175 + $0x10] sm:$0xf]
    %v181 = vld [vmem:[%s175 + $0x14] sm:$0xf]
    %v182 = vld [vmem:[%s175 + $0x18] sm:$0xf]
    %v183 = vld [vmem:[%s175 + $0x1c] sm:$0xf]
    %v184 = vld [vmem:[%s175 + $0x20] sm:$0xf]
    %v185 = vld [vmem:[%s175 + $0x24] sm:$0xf]
    %v186 = vld [vmem:[%s175 + $0x28] sm:$0xf]
    %v187 = vld [vmem:[%s175 + $0x2c] sm:$0xf]
    %v188 = vld [vmem:[%s175 + $0x30] sm:$0xf]
    %v189 = vld [vmem:[%s175 + $0x34] sm:$0xf]
    %v190 = vld [vmem:[%s175 + $0x38] sm:$0xf]
    %v191 = vld [vmem:[%s175 + $0x3c] sm:$0xf]
    %v192 = vlaneseq
    %v193 = vshrl.u32 %v192, 7
    %v194 = vsub.s32 2, %v193
    %v195 = vrot.slane %v37, %v194
    %v212 = vunpack.c.l.b16 %v176
    %v213 = vunpack.c.l.b16 %v177
    %v214 = vunpack.c.l.b16 %v178
    %v215 = vunpack.c.l.b16 %v179
    %v216 = vunpack.c.l.b16 %v180
    %v217 = vunpack.c.l.b16 %v181
    %v218 = vunpack.c.l.b16 %v182
    %v219 = vunpack.c.l.b16 %v183
    %v220 = vunpack.c.l.b16 %v184
    %v221 = vunpack.c.l.b16 %v185
    %v222 = vunpack.c.l.b16 %v186
    %v223 = vunpack.c.l.b16 %v187
    %v224 = vunpack.c.l.b16 %v188
    %v225 = vunpack.c.l.b16 %v189
    %v226 = vunpack.c.l.b16 %v190
    %v227 = vunpack.c.l.b16 %v191
    %v228 = vpack.c.b16 %v213, %v212
    %v229 = vpack.c.b16 %v215, %v214
    %v230 = vpack.c.b16 %v217, %v216
    %v231 = vpack.c.b16 %v219, %v218
    %v232 = vpack.c.b16 %v221, %v220
    %v233 = vpack.c.b16 %v223, %v222
    %v234 = vpack.c.b16 %v225, %v224
    %v235 = vpack.c.b16 %v227, %v226
    %244 = vmatprep.subr.bf16.mxu0 0
    %245 = vmatpush1.bf16.msra.mxu0 %v235
    %246 = vmatprep.subr.bf16.mxu0 0
    %247 = vmatpush1.bf16.msra.mxu0 %v234
    %248 = vmatprep.subr.bf16.mxu0 0
    %249 = vmatpush1.bf16.msra.mxu0 %v233
    %250 = vmatprep.subr.bf16.mxu0 0
    %251 = vmatpush1.bf16.msra.mxu0 %v232
    %252 = vmatprep.subr.bf16.mxu0 0
    %253 = vmatpush1.bf16.msra.mxu0 %v231
    %254 = vmatprep.subr.bf16.mxu0 0
    %255 = vmatpush1.bf16.msra.mxu0 %v230
    %256 = vmatprep.subr.bf16.mxu0 0
    %257 = vmatpush1.bf16.msra.mxu0 %v229
    %258 = vmatprep.subr.bf16.mxu0 0
    %259 = vmatpush1.bf16.msra.mxu0 %v228
    %260 = vmatprep.subr.bf16.mxu0 0
    %261 = vmatpush2.bf16.msra.mxu0 0
    %262 = vmatprep.subr.bf16.mxu0 0
    %263 = vmatpush2.bf16.msra.mxu0 0
    %264 = vmatprep.subr.bf16.mxu0 0
    %265 = vmatpush2.bf16.msra.mxu0 0
    %266 = vmatprep.subr.bf16.mxu0 0
    %267 = vmatpush2.bf16.msra.mxu0 0
    %268 = vmatprep.subr.bf16.mxu0 0
    %269 = vmatpush2.bf16.msra.mxu0 0
    %270 = vmatprep.subr.bf16.mxu0 0
    %271 = vmatpush2.bf16.msra.mxu0 0
    %272 = vmatprep.subr.bf16.mxu0 0
    %273 = vmatpush2.bf16.msra.mxu0 0
    %274 = vmatprep.subr.bf16.mxu0 0
    %275 = vmatpush2.bf16.msra.mxu0 0
    %276 = vmatprep.mubr.bf16.mxu0 0
    %277 = vmatmul.mubr.bf16.gmra.mxu0 %v174
    %v278 = vpop.f32.mrf.mxu0
    %v279 = vadd.f32 %v195, %v278
    %v280 = vpop.f32.mrf.mxu0
    %v281 = vpop.f32.mrf.mxu0
    %v282 = vpop.f32.mrf.mxu0
    %283 = vdwg.mxu0
    %v284 = vmax.f32 %v279, 0.0
    %v285 = vpack.c.bf16 %v284, %v284
    %s286 = scalar_lea.vmem [#allocation2], 128
    %v287 = vld [vmem:[%s286] sm:$0xf]
    %v288 = vld [vmem:[%s286 + $0x4] sm:$0xf]
    %v289 = vld [vmem:[%s286 + $0x8] sm:$0xf]
    %v290 = vld [vmem:[%s286 + $0xc] sm:$0xf]
    %v291 = vld [vmem:[%s286 + $0x10] sm:$0xf]
    %v292 = vld [vmem:[%s286 + $0x14] sm:$0xf]
    %v293 = vld [vmem:[%s286 + $0x18] sm:$0xf]
    %v294 = vld [vmem:[%s286 + $0x1c] sm:$0xf]
    %v295 = vld [vmem:[%s286 + $0x20] sm:$0xf]
    %v296 = vld [vmem:[%s286 + $0x24] sm:$0xf]
    %v297 = vld [vmem:[%s286 + $0x28] sm:$0xf]
    %v298 = vld [vmem:[%s286 + $0x2c] sm:$0xf]
    %v299 = vld [vmem:[%s286 + $0x30] sm:$0xf]
    %v300 = vld [vmem:[%s286 + $0x34] sm:$0xf]
    %v301 = vld [vmem:[%s286 + $0x38] sm:$0xf]
    %v302 = vld [vmem:[%s286 + $0x3c] sm:$0xf]
    %v303 = vlaneseq
    %v304 = vshrl.u32 %v303, 7
    %v305 = vsub.s32 3, %v304
    %v306 = vrot.slane %v37, %v305
    %v323 = vunpack.c.l.b16 %v287
    %v324 = vunpack.c.l.b16 %v288
    %v325 = vunpack.c.l.b16 %v289
    %v326 = vunpack.c.l.b16 %v290
    %v327 = vunpack.c.l.b16 %v291
    %v328 = vunpack.c.l.b16 %v292
    %v329 = vunpack.c.l.b16 %v293
    %v330 = vunpack.c.l.b16 %v294
    %v331 = vunpack.c.l.b16 %v295
    %v332 = vunpack.c.l.b16 %v296
    %v333 = vunpack.c.l.b16 %v297
    %v334 = vunpack.c.l.b16 %v298
    %v335 = vunpack.c.l.b16 %v299
    %v336 = vunpack.c.l.b16 %v300
    %v337 = vunpack.c.l.b16 %v301
    %v338 = vunpack.c.l.b16 %v302
    %v339 = vpack.c.b16 %v324, %v323
    %v340 = vpack.c.b16 %v326, %v325
    %v341 = vpack.c.b16 %v328, %v327
    %v342 = vpack.c.b16 %v330, %v329
    %v343 = vpack.c.b16 %v332, %v331
    %v344 = vpack.c.b16 %v334, %v333
    %v345 = vpack.c.b16 %v336, %v335
    %v346 = vpack.c.b16 %v338, %v337
    %355 = vmatprep.subr.bf16.mxu0 0
    %356 = vmatpush1.bf16.msra.mxu0 %v346
    %357 = vmatprep.subr.bf16.mxu0 0
    %358 = vmatpush1.bf16.msra.mxu0 %v345
    %359 = vmatprep.subr.bf16.mxu0 0
    %360 = vmatpush1.bf16.msra.mxu0 %v344
    %361 = vmatprep.subr.bf16.mxu0 0
    %362 = vmatpush1.bf16.msra.mxu0 %v343
    %363 = vmatprep.subr.bf16.mxu0 0
    %364 = vmatpush1.bf16.msra.mxu0 %v342
    %365 = vmatprep.subr.bf16.mxu0 0
    %366 = vmatpush1.bf16.msra.mxu0 %v341
    %367 = vmatprep.subr.bf16.mxu0 0
    %368 = vmatpush1.bf16.msra.mxu0 %v340
    %369 = vmatprep.subr.bf16.mxu0 0
    %370 = vmatpush1.bf16.msra.mxu0 %v339
    %371 = vmatprep.subr.bf16.mxu0 0
    %372 = vmatpush2.bf16.msra.mxu0 0
    %373 = vmatprep.subr.bf16.mxu0 0
    %374 = vmatpush2.bf16.msra.mxu0 0
    %375 = vmatprep.subr.bf16.mxu0 0
    %376 = vmatpush2.bf16.msra.mxu0 0
    %377 = vmatprep.subr.bf16.mxu0 0
    %378 = vmatpush2.bf16.msra.mxu0 0
    %379 = vmatprep.subr.bf16.mxu0 0
    %380 = vmatpush2.bf16.msra.mxu0 0
    %381 = vmatprep.subr.bf16.mxu0 0
    %382 = vmatpush2.bf16.msra.mxu0 0
    %383 = vmatprep.subr.bf16.mxu0 0
    %384 = vmatpush2.bf16.msra.mxu0 0
    %385 = vmatprep.subr.bf16.mxu0 0
    %386 = vmatpush2.bf16.msra.mxu0 0
    %387 = vmatprep.mubr.bf16.mxu0 0
    %388 = vmatmul.mubr.bf16.gmra.mxu0 %v285
    %v389 = vpop.f32.mrf.mxu0
    %v390 = vadd.f32 %v306, %v389
    %v391 = vpop.f32.mrf.mxu0
    %v392 = vpop.f32.mrf.mxu0
    %v393 = vpop.f32.mrf.mxu0
    %394 = vdwg.mxu0
    %v395 = vmax.f32 %v390, 0.0
    %v396 = vpack.c.bf16 %v395, %v395
    %v397 = vld [vmem:[%s3] sm:$0xf]
    %v398 = vld [vmem:[%s3 + $0x4] sm:$0xf]
    %v399 = vld [vmem:[%s3 + $0x8] sm:$0xf]
    %v400 = vld [vmem:[%s3 + $0xc] sm:$0xf]
    %v401 = vld [vmem:[%s3 + $0x10] sm:$0xf]
    %v402 = vld [vmem:[%s3 + $0x14] sm:$0xf]
    %v403 = vld [vmem:[%s3 + $0x18] sm:$0xf]
    %v404 = vld [vmem:[%s3 + $0x1c] sm:$0xf]
    %v405 = vld [vmem:[%s3 + $0x20] sm:$0xf]
    %v406 = vld [vmem:[%s3 + $0x24] sm:$0xf]
    %v407 = vld [vmem:[%s3 + $0x28] sm:$0xf]
    %v408 = vld [vmem:[%s3 + $0x2c] sm:$0xf]
    %v409 = vld [vmem:[%s3 + $0x30] sm:$0xf]
    %v410 = vld [vmem:[%s3 + $0x34] sm:$0xf]
    %v411 = vld [vmem:[%s3 + $0x38] sm:$0xf]
    %v412 = vld [vmem:[%s3 + $0x3c] sm:$0xf]
    %v413 = vlaneseq
    %v414 = vshrl.u32 %v413, 7
    %v415 = vsub.s32 4, %v414
    %v416 = vrot.slane %v37, %v415
    %v433 = vunpack.c.l.b16 %v397
    %v434 = vunpack.c.l.b16 %v398
    %v435 = vunpack.c.l.b16 %v399
    %v436 = vunpack.c.l.b16 %v400
    %v437 = vunpack.c.l.b16 %v401
    %v438 = vunpack.c.l.b16 %v402
    %v439 = vunpack.c.l.b16 %v403
    %v440 = vunpack.c.l.b16 %v404
    %v441 = vunpack.c.l.b16 %v405
    %v442 = vunpack.c.l.b16 %v406
    %v443 = vunpack.c.l.b16 %v407
    %v444 = vunpack.c.l.b16 %v408
    %v445 = vunpack.c.l.b16 %v409
    %v446 = vunpack.c.l.b16 %v410
    %v447 = vunpack.c.l.b16 %v411
    %v448 = vunpack.c.l.b16 %v412
    %v449 = vpack.c.b16 %v434, %v433
    %v450 = vpack.c.b16 %v436, %v435
    %v451 = vpack.c.b16 %v438, %v437
    %v452 = vpack.c.b16 %v440, %v439
    %v453 = vpack.c.b16 %v442, %v441
    %v454 = vpack.c.b16 %v444, %v443
    %v455 = vpack.c.b16 %v446, %v445
    %v456 = vpack.c.b16 %v448, %v447
    %465 = vmatprep.subr.bf16.mxu0 0
    %466 = vmatpush1.bf16.msra.mxu0 %v456
    %467 = vmatprep.subr.bf16.mxu0 0
    %468 = vmatpush1.bf16.msra.mxu0 %v455
    %469 = vmatprep.subr.bf16.mxu0 0
    %470 = vmatpush1.bf16.msra.mxu0 %v454
    %471 = vmatprep.subr.bf16.mxu0 0
    %472 = vmatpush1.bf16.msra.mxu0 %v453
    %473 = vmatprep.subr.bf16.mxu0 0
    %474 = vmatpush1.bf16.msra.mxu0 %v452
    %475 = vmatprep.subr.bf16.mxu0 0
    %476 = vmatpush1.bf16.msra.mxu0 %v451
    %477 = vmatprep.subr.bf16.mxu0 0
    %478 = vmatpush1.bf16.msra.mxu0 %v450
    %479 = vmatprep.subr.bf16.mxu0 0
    %480 = vmatpush1.bf16.msra.mxu0 %v449
    %481 = vmatprep.subr.bf16.mxu0 0
    %482 = vmatpush2.bf16.msra.mxu0 0
    %483 = vmatprep.subr.bf16.mxu0 0
    %484 = vmatpush2.bf16.msra.mxu0 0
    %485 = vmatprep.subr.bf16.mxu0 0
    %486 = vmatpush2.bf16.msra.mxu0 0
    %487 = vmatprep.subr.bf16.mxu0 0
    %488 = vmatpush2.bf16.msra.mxu0 0
    %489 = vmatprep.subr.bf16.mxu0 0
    %490 = vmatpush2.bf16.msra.mxu0 0
    %491 = vmatprep.subr.bf16.mxu0 0
    %492 = vmatpush2.bf16.msra.mxu0 0
    %493 = vmatprep.subr.bf16.mxu0 0
    %494 = vmatpush2.bf16.msra.mxu0 0
    %495 = vmatprep.subr.bf16.mxu0 0
    %496 = vmatpush2.bf16.msra.mxu0 0
    %497 = vmatprep.mubr.bf16.mxu0 0
    %498 = vmatmul.mubr.bf16.gmra.mxu0 %v396
    %v499 = vpop.f32.mrf.mxu0
    %v500 = vadd.f32 %v416, %v499
    %v501 = vpop.f32.mrf.mxu0
    %v502 = vpop.f32.mrf.mxu0
    %v503 = vpop.f32.mrf.mxu0
    %504 = vdwg.mxu0
    %506 = vrot.lane.b32.xlu0 %v500, 1
    %v507 = vpop.permute.xlu0 %506
    %v509 = vsub.f32 %v500, %v507
    %v510 = vsub.f32 0.0, %v509
    %v511 = vmul.f32 %v510, 1.442695
    %v512 = vpow.pop %v511
    %v513 = vadd.f32 %v512, 1.0
    %v514 = vrcp.pop %v513
    %v515 = vmul.f32 1.0, %v514
    %v516 = vsub.f32 1.0, %v515
    %518 = vrot.lane.b32.xlu0 %v516, 127
    %v519 = vpop.permute.xlu0 %518
    %vm521 = vcmask 7168
    %522 = vst.msk [vmem:[%s5] sm:$0xff] %vm521, %v519
    %vm523 = vcmask 15368
    %524 = vst.msk [vmem:[%s5] sm:$0xff] %vm523, %v515
    // Predicated region
    $region26: #{tpu_custom_call.1} parent=1 // pred_check
      _
    $region27: #{tpu_custom_call.1} parent=1 // pred_check_branch
      %526 = sbr.rel (0) target = $region29
    $region28: #{tpu_custom_call.1} parent=1 // pred_region
      _
    $region29: #{tpu_custom_call.1} parent=1 // pred_fallthru
      _
    // Predicated region
    $region30: #{tpu_custom_call.1} parent=1 // pred_check
      _
    $region31: #{tpu_custom_call.1} parent=1 // pred_check_branch
      %528 = sbr.rel (0) target = $region33
    $region32: #{tpu_custom_call.1} parent=1 // pred_region
      _
    $region33: #{tpu_custom_call.1} parent=1 // pred_fallthru
      _
    %529 = vsyncpa [#allocation3], 1

</llo_original>
